<compile_context>
chip_gen: v5e
topology: v5e:2x2
jax: 0.10.0
libtpu: 0.0.40
codegen_flags: <defaults>
</compile_context>

<pallas_src>
import jax
import jax.numpy as jnp
from jax.experimental import pallas as pl
from jax.experimental.pallas import tpu as pltpu


def _round_up(x, m):
    return (x + m - 1) // m * m


def _critic_kernel(s_ref, a_ref, w1s_ref, w1a_ref, b1_ref,
                   w2_ref, b2_ref, w3_ref, b3_ref, out_ref):
    """One batch tile of the critic MLP."""
    # fc1: split matmul replaces cat([state, action]) @ W1.
    h1 = jnp.dot(s_ref[...], w1s_ref[...], preferred_element_type=jnp.float32)
    h1 = h1 + jnp.dot(a_ref[...], w1a_ref[...], preferred_element_type=jnp.float32)
    h1 = jnp.maximum(h1 + b1_ref[...], 0.0)                       # ReLU

    # fc2
    h2 = jnp.dot(h1, w2_ref[...], preferred_element_type=jnp.float32)
    h2 = jnp.maximum(h2 + b2_ref[...], 0.0)                       # ReLU

    # fc3 (N=1): VPU multiply + lane reduction, no MXU round trip.
    q = jnp.sum(h2 * w3_ref[...], axis=-1, keepdims=True) + b3_ref[...]
    # TODO(synk): lane-dense [1, TB] output layout (needs a sublane->lane
    # relayout) deferred; output bytes are B*4 and negligible at these shapes.
    out_ref[...] = q.astype(out_ref.dtype)


def critic_forward(state, action, params, *, block_b=512):
    """Pallas forward pass of the Critic.

    state:  [B, state_dim] f32
    action: [B, action_dim] f32
    params: dict with w1_s [S, H], w1_a [A, H], b1 [1, H],
            w2 [H, H], b2 [1, H], w3 [1, H], b3 [1, 1]
    returns [B, 1] f32
    """
    B, S = state.shape
    A = action.shape[1]

    # Batch tile: multiple of 8 sublanes, capped at block_b; pad ragged batches.
    tb = max(8, _round_up(min(block_b, _round_up(B, 8)), 8))
    b_pad = _round_up(B, tb)
    if b_pad != B:
        state = jnp.pad(state, ((0, b_pad - B), (0, 0)))
        action = jnp.pad(action, ((0, b_pad - B), (0, 0)))
    num_tiles = b_pad // tb

    tile_map = lambda i: (i, 0)      # activation tiles walk the batch axis
    resident = lambda i: (0, 0)      # weights/biases: same block every step -> stay in VMEM

    out = pl.pallas_call(
        _critic_kernel,
        out_shape=jax.ShapeDtypeStruct((b_pad, 1), jnp.float32),
        grid=(num_tiles,),
        in_specs=[
            pl.BlockSpec((tb, S), tile_map),
            pl.BlockSpec((tb, A), tile_map),
            pl.BlockSpec(params["w1_s"].shape, resident),
            pl.BlockSpec(params["w1_a"].shape, resident),
            pl.BlockSpec(params["b1"].shape, resident),
            pl.BlockSpec(params["w2"].shape, resident),
            pl.BlockSpec(params["b2"].shape, resident),
            pl.BlockSpec(params["w3"].shape, resident),
            pl.BlockSpec(params["b3"].shape, resident),
        ],
        out_specs=pl.BlockSpec((tb, 1), tile_map),
        compiler_params=pltpu.CompilerParams(
            dimension_semantics=("parallel",)),   # v7x: shard batch tiles over both TCs
    )(state, action, params["w1_s"], params["w1_a"], params["b1"],
      params["w2"], params["b2"], params["w3"], params["b3"])

    return out[:B]


def init_critic_params(key, state_dim, action_dim, hidden_dim):
    """Deterministic synthetic parameter init (Linear-like uniform fan-in)."""
    def linear(k, fan_in, fan_out):
        kw, kb = jax.random.split(k)
        bound = 1.0 / jnp.sqrt(fan_in)
        w = jax.random.uniform(kw, (fan_in, fan_out), jnp.float32, -bound, bound)
        b = jax.random.uniform(kb, (1, fan_out), jnp.float32, -bound, bound)
        return w, b

    k1, k2, k3 = jax.random.split(key, 3)
    w1, b1 = linear(k1, state_dim + action_dim, hidden_dim)
    w2, b2 = linear(k2, hidden_dim, hidden_dim)
    w3, b3 = linear(k3, hidden_dim, 1)
    return {
        "w1_s": w1[:state_dim],   # [S, H]  (fc1 weight split: state part)
        "w1_a": w1[state_dim:],   # [A, H]  (fc1 weight split: action part)
        "b1": b1,                 # [1, H]
        "w2": w2, "b2": b2,       # [H, H], [1, H]
        "w3": w3.T,               # [1, H]  row form for the VPU reduction
        "b3": b3,                 # [1, 1]
    }


def critic_reference(state, action, params):
    """Pure-JAX reference matching the PyTorch forward."""
    x = jnp.concatenate([state, action], axis=-1)
    w1 = jnp.concatenate([params["w1_s"], params["w1_a"]], axis=0)
    h1 = jnp.maximum(x @ w1 + params["b1"], 0.0)
    h2 = jnp.maximum(h1 @ params["w2"] + params["b2"], 0.0)
    return h2 @ params["w3"].T + params["b3"]


if __name__ == "__main__":
    B, STATE_DIM, ACTION_DIM, HIDDEN_DIM = 8, 12, 4, 32

    key = jax.random.PRNGKey(0)
    k_params, k_state, k_action = jax.random.split(key, 3)

    params = init_critic_params(k_params, STATE_DIM, ACTION_DIM, HIDDEN_DIM)
    state = jax.random.normal(k_state, (B, STATE_DIM), jnp.float32)
    action = jax.random.normal(k_action, (B, ACTION_DIM), jnp.float32)

    q = jax.block_until_ready(critic_forward(state, action, params))
    q_ref = critic_reference(state, action, params)
    assert q.shape == (B, 1)
    assert jnp.allclose(q, q_ref, atol=1e-5, rtol=1e-5)

    # Exercise the batch grid + padding path (multiple tiles, ragged batch).
    B2 = 200
    k_s2, k_a2 = jax.random.split(jax.random.PRNGKey(1))
    state2 = jax.random.normal(k_s2, (B2, STATE_DIM), jnp.float32)
    action2 = jax.random.normal(k_a2, (B2, ACTION_DIM), jnp.float32)
    q2 = jax.block_until_ready(critic_forward(state2, action2, params, block_b=64))
    q2_ref = critic_reference(state2, action2, params)
    assert q2.shape == (B2, 1)
    assert jnp.allclose(q2, q2_ref, atol=1e-5, rtol=1e-5)

    print("KERNEL_OK")
</pallas_src>

<mosaic_0001>
module attributes {stable_mosaic.version = 11 : i64} {
  func.func @_critic_kernel(%arg0: i32, %arg1: memref<8x12xf32, #tpu.memory_space<vmem>>, %arg2: memref<8x4xf32, #tpu.memory_space<vmem>>, %arg3: memref<12x32xf32, #tpu.memory_space<vmem>>, %arg4: memref<4x32xf32, #tpu.memory_space<vmem>>, %arg5: memref<1x32xf32, #tpu.memory_space<vmem>>, %arg6: memref<32x32xf32, #tpu.memory_space<vmem>>, %arg7: memref<1x32xf32, #tpu.memory_space<vmem>>, %arg8: memref<1x32xf32, #tpu.memory_space<vmem>>, %arg9: memref<1x1xf32, #tpu.memory_space<vmem>>, %arg10: memref<8x1xf32, #tpu.memory_space<vmem>>) attributes {dimension_semantics = [#tpu.dimension_semantics<parallel>], iteration_bounds = array<i64: 1>, scalar_prefetch = 0 : i64, scratch_operands = 0 : i64, tpu.core_type = #tpu.core_type<tc>, window_params = [{transform_indices = @transform_0, window_bounds = array<i64: 8, 12>}, {transform_indices = @transform_1, window_bounds = array<i64: 8, 4>}, {pipeline_mode = #tpu.pipeline_mode<synchronous>, transform_indices = @transform_2, window_bounds = array<i64: 12, 32>}, {pipeline_mode = #tpu.pipeline_mode<synchronous>, transform_indices = @transform_3, window_bounds = array<i64: 4, 32>}, {pipeline_mode = #tpu.pipeline_mode<synchronous>, transform_indices = @transform_4, window_bounds = array<i64: 1, 32>}, {pipeline_mode = #tpu.pipeline_mode<synchronous>, transform_indices = @transform_5, window_bounds = array<i64: 32, 32>}, {pipeline_mode = #tpu.pipeline_mode<synchronous>, transform_indices = @transform_6, window_bounds = array<i64: 1, 32>}, {pipeline_mode = #tpu.pipeline_mode<synchronous>, transform_indices = @transform_7, window_bounds = array<i64: 1, 32>}, {pipeline_mode = #tpu.pipeline_mode<synchronous>, transform_indices = @transform_8, window_bounds = array<i64: 1, 1>}, {transform_indices = @transform_9, window_bounds = array<i64: 8, 1>}]} {
    %c0 = arith.constant 0 : index
    %c0_0 = arith.constant 0 : index
    %0 = vector.load %arg1[%c0, %c0_0] : memref<8x12xf32, #tpu.memory_space<vmem>>, vector<8x12xf32>
    %c0_1 = arith.constant 0 : index
    %c0_2 = arith.constant 0 : index
    %1 = vector.load %arg3[%c0_1, %c0_2] : memref<12x32xf32, #tpu.memory_space<vmem>>, vector<12x32xf32>
    %cst = arith.constant dense<0.000000e+00> : vector<8x32xf32>
    %2 = tpu.matmul %0, %1, %cst {dimension_numbers = #tpu.dot_dimension_numbers<[1], [0], [0], [1], [0, 0, 1, 1], [], []>} : vector<8x12xf32>, vector<12x32xf32>, vector<8x32xf32> -> vector<8x32xf32>
    %c0_3 = arith.constant 0 : index
    %c0_4 = arith.constant 0 : index
    %3 = vector.load %arg2[%c0_3, %c0_4] : memref<8x4xf32, #tpu.memory_space<vmem>>, vector<8x4xf32>
    %c0_5 = arith.constant 0 : index
    %c0_6 = arith.constant 0 : index
    %4 = vector.load %arg4[%c0_5, %c0_6] : memref<4x32xf32, #tpu.memory_space<vmem>>, vector<4x32xf32>
    %cst_7 = arith.constant dense<0.000000e+00> : vector<8x32xf32>
    %5 = tpu.matmul %3, %4, %cst_7 {dimension_numbers = #tpu.dot_dimension_numbers<[1], [0], [0], [1], [0, 0, 1, 1], [], []>} : vector<8x4xf32>, vector<4x32xf32>, vector<8x32xf32> -> vector<8x32xf32>
    %6 = arith.addf %2, %5 : vector<8x32xf32>
    %c0_8 = arith.constant 0 : index
    %c0_9 = arith.constant 0 : index
    %7 = vector.load %arg5[%c0_8, %c0_9] : memref<1x32xf32, #tpu.memory_space<vmem>>, vector<1x32xf32>
    %8 = vector.broadcast %7 : vector<1x32xf32> to vector<8x32xf32>
    %9 = arith.addf %6, %8 : vector<8x32xf32>
    %cst_10 = arith.constant 0.000000e+00 : f32
    %10 = vector.broadcast %cst_10 : f32 to vector<8x32xf32>
    %11 = arith.maximumf %9, %10 : vector<8x32xf32>
    %c0_11 = arith.constant 0 : index
    %c0_12 = arith.constant 0 : index
    %12 = vector.load %arg6[%c0_11, %c0_12] : memref<32x32xf32, #tpu.memory_space<vmem>>, vector<32x32xf32>
    %cst_13 = arith.constant dense<0.000000e+00> : vector<8x32xf32>
    %13 = tpu.matmul %11, %12, %cst_13 {dimension_numbers = #tpu.dot_dimension_numbers<[1], [0], [0], [1], [0, 0, 1, 1], [], []>} : vector<8x32xf32>, vector<32x32xf32>, vector<8x32xf32> -> vector<8x32xf32>
    %c0_14 = arith.constant 0 : index
    %c0_15 = arith.constant 0 : index
    %14 = vector.load %arg7[%c0_14, %c0_15] : memref<1x32xf32, #tpu.memory_space<vmem>>, vector<1x32xf32>
    %15 = vector.broadcast %14 : vector<1x32xf32> to vector<8x32xf32>
    %16 = arith.addf %13, %15 : vector<8x32xf32>
    %cst_16 = arith.constant 0.000000e+00 : f32
    %17 = vector.broadcast %cst_16 : f32 to vector<8x32xf32>
    %18 = arith.maximumf %16, %17 : vector<8x32xf32>
    %c0_17 = arith.constant 0 : index
    %c0_18 = arith.constant 0 : index
    %19 = vector.load %arg8[%c0_17, %c0_18] : memref<1x32xf32, #tpu.memory_space<vmem>>, vector<1x32xf32>
    %20 = vector.broadcast %19 : vector<1x32xf32> to vector<8x32xf32>
    %21 = arith.mulf %18, %20 : vector<8x32xf32>
    %cst_19 = arith.constant dense<0.000000e+00> : vector<8xf32>
    %22 = vector.multi_reduction <add>, %21, %cst_19 [1] : vector<8x32xf32> to vector<8xf32>
    %23 = vector.shape_cast %22 : vector<8xf32> to vector<8x1xf32>
    %c0_20 = arith.constant 0 : index
    %c0_21 = arith.constant 0 : index
    %24 = vector.load %arg9[%c0_20, %c0_21] : memref<1x1xf32, #tpu.memory_space<vmem>>, vector<1x1xf32>
    %25 = vector.broadcast %24 : vector<1x1xf32> to vector<8x1xf32>
    %26 = arith.addf %23, %25 : vector<8x1xf32>
    %c0_22 = arith.constant 0 : index
    %c0_23 = arith.constant 0 : index
    %27 = vector.load %arg10[%c0_22, %c0_23] : memref<8x1xf32, #tpu.memory_space<vmem>>, vector<8x1xf32>
    tpu.vector_store %arg10[%c0_22, %c0_23], %26 {strides = array<i32>} : memref<8x1xf32, #tpu.memory_space<vmem>>, vector<8x1xf32>,
    return
  }
  func.func @transform_0(%arg0: i32) -> (i32, i32) {
    %c0_i32 = arith.constant 0 : i32
    %c0_i32_0 = arith.constant 0 : i32
    return %arg0, %c0_i32 : i32, i32
  }
  func.func @transform_1(%arg0: i32) -> (i32, i32) {
    %c0_i32 = arith.constant 0 : i32
    %c0_i32_0 = arith.constant 0 : i32
    return %arg0, %c0_i32 : i32, i32
  }
  func.func @transform_2(%arg0: i32) -> (i32, i32) {
    %c0_i32 = arith.constant 0 : i32
    %c0_i32_0 = arith.constant 0 : i32
    %c0_i32_1 = arith.constant 0 : i32
    return %c0_i32, %c0_i32_0 : i32, i32
  }
  func.func @transform_3(%arg0: i32) -> (i32, i32) {
    %c0_i32 = arith.constant 0 : i32
    %c0_i32_0 = arith.constant 0 : i32
    %c0_i32_1 = arith.constant 0 : i32
    return %c0_i32, %c0_i32_0 : i32, i32
  }
  func.func @transform_4(%arg0: i32) -> (i32, i32) {
    %c0_i32 = arith.constant 0 : i32
    %c0_i32_0 = arith.constant 0 : i32
    %c0_i32_1 = arith.constant 0 : i32
    return %c0_i32, %c0_i32_0 : i32, i32
  }
  func.func @transform_5(%arg0: i32) -> (i32, i32) {
    %c0_i32 = arith.constant 0 : i32
    %c0_i32_0 = arith.constant 0 : i32
    %c0_i32_1 = arith.constant 0 : i32
    return %c0_i32, %c0_i32_0 : i32, i32
  }
  func.func @transform_6(%arg0: i32) -> (i32, i32) {
    %c0_i32 = arith.constant 0 : i32
    %c0_i32_0 = arith.constant 0 : i32
    %c0_i32_1 = arith.constant 0 : i32
    return %c0_i32, %c0_i32_0 : i32, i32
  }
  func.func @transform_7(%arg0: i32) -> (i32, i32) {
    %c0_i32 = arith.constant 0 : i32
    %c0_i32_0 = arith.constant 0 : i32
    %c0_i32_1 = arith.constant 0 : i32
    return %c0_i32, %c0_i32_0 : i32, i32
  }
  func.func @transform_8(%arg0: i32) -> (i32, i32) {
    %c0_i32 = arith.constant 0 : i32
    %c0_i32_0 = arith.constant 0 : i32
    %c0_i32_1 = arith.constant 0 : i32
    return %c0_i32, %c0_i32_0 : i32, i32
  }
  func.func @transform_9(%arg0: i32) -> (i32, i32) {
    %c0_i32 = arith.constant 0 : i32
    %c0_i32_0 = arith.constant 0 : i32
    return %arg0, %c0_i32 : i32, i32
  }
}

</mosaic_0001>

<llo_original>
// kernel: tpu_custom_call.1
$region0: #{tpu_custom_call.1}
  #allocation0 [shape = 'u32[]', space=smem, size = 0x4, offset = 0x4, fixed_abs, tag = 'smem constant byte address 0x4 - core index']
  #allocation1 [shape = 'u32[72,128]{1,0:T(1,128)}', space=vmem, size = 0x9000, scoped, tag = 'internal scratch']
  #allocation2 [shape = 'f32[1,1]{1,0:T(1,128)S(1)}', space=vmem, size = 0x200, scoped, tag = 'scoped memory for tpu_custom_call.1']
  %s0 = inlined_call_operand.vmem [shape: f32[8,12], index: 0, kind: input, shape index: {}]
  %s1 = inlined_call_operand.vmem [shape: f32[8,4], index: 1, kind: input, shape index: {}]
  %s2 = inlined_call_operand.hbm [shape: f32[12,32], index: 2, kind: input, shape index: {}]
  %s3 = inlined_call_operand.vmem [shape: f32[4,32], index: 3, kind: input, shape index: {}]
  %s4 = inlined_call_operand.vmem [shape: f32[1,32], index: 4, kind: input, shape index: {}]
  %s5 = inlined_call_operand.hbm [shape: f32[32,32], index: 5, kind: input, shape index: {}]
  %s6 = inlined_call_operand.vmem [shape: f32[1,32], index: 6, kind: input, shape index: {}]
  %s7 = inlined_call_operand.vmem [shape: f32[1,32], index: 7, kind: input, shape index: {}]
  %s8 = inlined_call_operand.<no memory space> [shape: f32[1,1], index: 8, kind: input, shape index: {}]
  %s9 = inlined_call_operand.vmem [shape: f32[8,1], index: 9, kind: output, shape index: {}]
  %s10 = sld [smem:[#allocation0]]
  $region54: #{tpu_custom_call.1} parent=0
    _
  %s12 = ssub.s32 1, %s10
  %s13 = scalar_select 0, %s12, %s10
  %v14 = vstv %s8
  %15 = vst [vmem:[#allocation2] sm:$0x1] %v14
  $region1: #{tpu_custom_call.1} parent=0
    #allocation3 [shape = 'u8[8192]{0}', space=vmem, size = 0x2000, scoped, tag = 'input window, operand 2, single buffered']
    #allocation4 [shape = 's32[1]{0}', space=sflag, size = 0x4, scoped, tag = 'scoped memory for tpu_custom_call.1']
    #allocation5 [shape = 'u8[16384]{0}', space=vmem, size = 0x4000, scoped, tag = 'input window, operand 5, single buffered']
    #allocation6 [shape = 's32[1]{0}', space=sflag, size = 0x4, scoped, tag = 'scoped memory for tpu_custom_call.1']
    %16 = vsyncpa [#allocation4], 0
    %17 = vsyncpa [#allocation6], 0
    // Predicated region
    $region2: #{tpu_custom_call.1} parent=1 // pred_check
      _
    $region3: #{tpu_custom_call.1} parent=1 // pred_check_branch
      %19 = sbr.rel (0) target = $region5
    $region4: #{tpu_custom_call.1} parent=1 // pred_region
      _
    $region5: #{tpu_custom_call.1} parent=1 // pred_fallthru
      _
    // Predicated region
    $region6: #{tpu_custom_call.1} parent=1 // pred_check
      _
    $region7: #{tpu_custom_call.1} parent=1 // pred_check_branch
      %21 = sbr.rel (0) target = $region9
    $region8: #{tpu_custom_call.1} parent=1 // pred_region
      _
    $region9: #{tpu_custom_call.1} parent=1 // pred_fallthru
      _
    // Predicated region
    $region10: #{tpu_custom_call.1} parent=1 // pred_check
      _
    $region11: #{tpu_custom_call.1} parent=1 // pred_check_branch
      %23 = sbr.rel (0) target = $region13
    $region12: #{tpu_custom_call.1} parent=1 // pred_region
      %25 = vsyncadd [#allocation4], 0
      %s26 = sshll.u32 %s2, 4
      %s27 = int_to_ptr.hbm [resolvable:$true] %s26
      %s28 = sshll.u32 [#allocation3], 4
      %s29 = int_to_ptr.vmem [resolvable:$true] %s28
      %34 = dma.hbm_to_vmem [thread:$0]  %s27, 256, %s29, [#allocation4], 128, 128, 8
    $region13: #{tpu_custom_call.1} parent=1 // pred_fallthru
      _
    // Predicated region
    $region14: #{tpu_custom_call.1} parent=1 // pred_check
      _
    $region15: #{tpu_custom_call.1} parent=1 // pred_check_branch
      %36 = sbr.rel (0) target = $region17
    $region16: #{tpu_custom_call.1} parent=1 // pred_region
      _
    $region17: #{tpu_custom_call.1} parent=1 // pred_fallthru
      _
    // Predicated region
    $region18: #{tpu_custom_call.1} parent=1 // pred_check
      _
    $region19: #{tpu_custom_call.1} parent=1 // pred_check_branch
      %38 = sbr.rel (0) target = $region21
    $region20: #{tpu_custom_call.1} parent=1 // pred_region
      _
    $region21: #{tpu_custom_call.1} parent=1 // pred_fallthru
      _
    // Predicated region
    $region22: #{tpu_custom_call.1} parent=1 // pred_check
      _
    $region23: #{tpu_custom_call.1} parent=1 // pred_check_branch
      %40 = sbr.rel (0) target = $region25
    $region24: #{tpu_custom_call.1} parent=1 // pred_region
      %42 = vsyncadd [#allocation6], 0
      %s43 = sshll.u32 %s5, 4
      %s44 = int_to_ptr.hbm [resolvable:$true] %s43
      %s45 = sshll.u32 [#allocation5], 4
      %s46 = int_to_ptr.vmem [resolvable:$true] %s45
      %51 = dma.hbm_to_vmem [thread:$0]  %s44, 512, %s46, [#allocation6], 128, 128, 8
    $region25: #{tpu_custom_call.1} parent=1 // pred_fallthru
      _
    // Predicated region
    $region26: #{tpu_custom_call.1} parent=1 // pred_check
      _
    $region27: #{tpu_custom_call.1} parent=1 // pred_check_branch
      %53 = sbr.rel (0) target = $region29
    $region28: #{tpu_custom_call.1} parent=1 // pred_region
      _
    $region29: #{tpu_custom_call.1} parent=1 // pred_fallthru
      _
    // Predicated region
    $region30: #{tpu_custom_call.1} parent=1 // pred_check
      _
    $region31: #{tpu_custom_call.1} parent=1 // pred_check_branch
      %55 = sbr.rel (0) target = $region33
    $region32: #{tpu_custom_call.1} parent=1 // pred_region
      _
    $region33: #{tpu_custom_call.1} parent=1 // pred_fallthru
      _
    // Predicated region
    $region34: #{tpu_custom_call.1} parent=1 // pred_check
      _
    $region35: #{tpu_custom_call.1} parent=1 // pred_check_branch
      %57 = sbr.rel (0) target = $region37
    $region36: #{tpu_custom_call.1} parent=1 // pred_region
      _
    $region37: #{tpu_custom_call.1} parent=1 // pred_fallthru
      _
    // Predicated region
    $region38: #{tpu_custom_call.1} parent=1 // pred_check
      _
    $region39: #{tpu_custom_call.1} parent=1 // pred_check_branch
      %59 = sbr.rel (0) target = $region41
    $region40: #{tpu_custom_call.1} parent=1 // pred_region
      %61 = dma.done [#allocation4], 256
    $region41: #{tpu_custom_call.1} parent=1 // pred_fallthru
      _
    // Predicated region
    $region42: #{tpu_custom_call.1} parent=1 // pred_check
      _
    $region43: #{tpu_custom_call.1} parent=1 // pred_check_branch
      %63 = sbr.rel (0) target = $region45
    $region44: #{tpu_custom_call.1} parent=1 // pred_region
      %65 = dma.done [#allocation6], 512
    $region45: #{tpu_custom_call.1} parent=1 // pred_fallthru
      _
    %v66 = vld [vmem:[%s0] sm:$0xff]
    %v67 = vld [vmem:[#allocation3] sm:$0xff]
    %v68 = vld [vmem:[#allocation3 + $0x8] sm:$0xf]
    %v69 = vld [vmem:[%s1] sm:$0xff]
    %v70 = vld [vmem:[%s3] sm:$0xf]
    %vm71 = vcmask 31744
    %v73 = vsel %vm71, %v69, 0
    %vm75 = vcmask 1043456
    %v77 = vsel %vm75, %v70, 0
    %79 = vmatpush.msra.mxu0 0.0
    %80 = vmatpush.msra.mxu0 0.0
    %81 = vmatpush.msra.mxu0 0.0
    %82 = vmatpush.msra.mxu0 0.0
    %83 = vmatpush.msra.mxu0 0.0
    %84 = vmatpush.msra.mxu0 0.0
    %85 = vmatpush.msra.mxu0 0.0
    %86 = vmatpush.msra.mxu0 0.0
    %87 = vmatpush.msra.mxu0 0.0
    %88 = vmatpush.msra.mxu0 0.0
    %89 = vmatpush.msra.mxu0 0.0
    %90 = vmatpush.msra.mxu0 0.0
    %91 = vmatpush.msra.mxu0 0.0
    %92 = vmatpush.msra.mxu0 0.0
    %93 = vmatpush.msra.mxu0 0.0
    %94 = vmatpush.msra.mxu0 %v77
    %95 = vmatmul.f32.gmra.mxu0 %v73
    %v96 = vpop.f32.mrf.mxu0
    %v97 = vadd.f32 0.0, %v96
    %98 = vdwg.mxu0
    %vm99 = vcmask 97280
    %v101 = vsel %vm99, %v66, 0
    %v104 = vsel %vm75, %v68, 0
    %106 = vmatpush.msra.mxu0 0.0
    %107 = vmatpush.msra.mxu0 0.0
    %108 = vmatpush.msra.mxu0 0.0
    %109 = vmatpush.msra.mxu0 0.0
    %110 = vmatpush.msra.mxu0 0.0
    %111 = vmatpush.msra.mxu0 0.0
    %112 = vmatpush.msra.mxu0 0.0
    %113 = vmatpush.msra.mxu0 0.0
    %114 = vmatpush.msra.mxu0 0.0
    %115 = vmatpush.msra.mxu0 0.0
    %116 = vmatpush.msra.mxu0 0.0
    %117 = vmatpush.msra.mxu0 0.0
    %118 = vmatpush.msra.mxu0 0.0
    %119 = vmatpush.msra.mxu0 0.0
    %120 = vmatpush.msra.mxu0 %v104
    %121 = vmatpush.msra.mxu0 %v67
    %122 = vmatmul.f32.gmra.mxu0 %v101
    %v123 = vpop.f32.mrf.mxu0
    %v124 = vadd.f32 %v97, %v123
    %125 = vdwg.mxu0
    %v126 = vld [vmem:[%s4] sm:$0x1]
    %v128 = vperm.slane %v126, 0
    %v130 = vadd.f32 %v124, %v128
    %v131 = vmax.f32 %v130, 0.0
    %v132 = vld [vmem:[#allocation5] sm:$0xff]
    %v133 = vld [vmem:[#allocation5 + $0x8] sm:$0xff]
    %v134 = vld [vmem:[#allocation5 + $0x10] sm:$0xff]
    %v135 = vld [vmem:[#allocation5 + $0x18] sm:$0xff]
    %v136 = vld [vmem:[%s6] sm:$0x1]
    %v138 = vperm.slane %v136, 0
    %vm140 = vcmask 261120
    %v142 = vsel %vm140, %v131, 0
    %144 = vmatpush.msra.mxu0 0.0
    %145 = vmatpush.msra.mxu0 0.0
    %146 = vmatpush.msra.mxu0 0.0
    %147 = vmatpush.msra.mxu0 0.0
    %148 = vmatpush.msra.mxu0 0.0
    %149 = vmatpush.msra.mxu0 0.0
    %150 = vmatpush.msra.mxu0 0.0
    %151 = vmatpush.msra.mxu0 0.0
    %152 = vmatpush.msra.mxu0 0.0
    %153 = vmatpush.msra.mxu0 0.0
    %154 = vmatpush.msra.mxu0 0.0
    %155 = vmatpush.msra.mxu0 0.0
    %156 = vmatpush.msra.mxu0 %v135
    %157 = vmatpush.msra.mxu0 %v134
    %158 = vmatpush.msra.mxu0 %v133
    %159 = vmatpush.msra.mxu0 %v132
    %160 = vmatmul.f32.gmra.mxu0 %v142
    %v161 = vpop.f32.mrf.mxu0
    %v162 = vadd.f32 %v138, %v161
    %163 = vdwg.mxu0
    %v164 = vmax.f32 %v162, 0.0
    %v165 = vld [vmem:[%s7] sm:$0x1]
    %v167 = vperm.slane %v165, 0
    %v169 = vmul.f32 %v164, %v167
    %v170 = vsel %vm140, %v169, 0.0
    %171 = vadd.xlane.f32.xlu0 %v170
    %v172 = vpop.xlane.xlu0 %171
    %v173 = vld [vmem:[#allocation2] sm:$0x1]
    %v175 = vperm.slane %v173, 0
    %v177 = vadd.f32 %v172, %v175
    %vm178 = vcmask 7168
    %179 = vst.msk [vmem:[%s9] sm:$0xff] %vm178, %v177
    // Predicated region
    $region46: #{tpu_custom_call.1} parent=1 // pred_check
      _
    $region47: #{tpu_custom_call.1} parent=1 // pred_check_branch
      %181 = sbr.rel (0) target = $region49
    $region48: #{tpu_custom_call.1} parent=1 // pred_region
      _
    $region49: #{tpu_custom_call.1} parent=1 // pred_fallthru
      _
    // Predicated region
    $region50: #{tpu_custom_call.1} parent=1 // pred_check
      _
    $region51: #{tpu_custom_call.1} parent=1 // pred_check_branch
      %183 = sbr.rel (0) target = $region53
    $region52: #{tpu_custom_call.1} parent=1 // pred_region
      _
    $region53: #{tpu_custom_call.1} parent=1 // pred_fallthru
      _
    %184 = vsyncpa [#allocation4], 1
    %185 = vsyncpa [#allocation6], 1

</llo_original>
